<compile_context>
chip_gen: v5e
topology: v5e:2x2
jax: 0.10.0
libtpu: 0.0.40
codegen_flags: <defaults>
</compile_context>

<pallas_src>
import functools

import jax
import jax.numpy as jnp
from jax.experimental import pallas as pl
from jax.experimental.pallas import tpu as pltpu

_LANE = 128
_SUBLANE = 8


def _round_up(x, m):
    return ((x + m - 1) // m) * m


def _fused_mlp_kernel(x_ref, *refs, num_layers):
    """Fused [Linear -> ReLU] * num_layers over one (Mtile, K0p) row tile.

    refs = (w0_ref, ..., w{L-1}_ref, b_all_ref, o_ref)
      x_ref  : (Mtile, K0p)          f32
      wL_ref : (K{L}p, N{L}p)        f32 or bf16, zero-padded, pre-transposed
      b_all  : (num_layers, Nmaxp)   f32, zero-padded
      o_ref  : (Mtile, NLastp)       f32
    Intermediate activations never leave vregs/VMEM.
    """
    o_ref = refs[-1]
    b_all_ref = refs[-2]
    w_refs = refs[:num_layers]

    b_all = b_all_ref[...]  # tiny; load once
    h = x_ref[...]
    for layer in range(num_layers):
        w = w_refs[layer][...]
        n_p = w.shape[1]
        # MXU matmul in the weight storage dtype, f32 accumulation.
        h = jnp.dot(h.astype(w.dtype), w, preferred_element_type=jnp.float32)
        # Bias + ReLU epilogue stays f32 on the VPU (no bf16 elementwise on v5e).
        h = jnp.maximum(h + b_all[layer, :n_p], 0.0)
    o_ref[...] = h.astype(o_ref.dtype)


def prepare_model_body_params(params, *, weight_dtype=jnp.float32):
    """One-time packing of ModelBody params for the fused kernel.

    params: list of (w, b) with w already (in_features, out_features)
    (i.e. pre-transposed relative to torch.nn.Linear's (out, in)), b (out,).
    Returns lane-padded weights (optionally bf16), one stacked f32 bias
    operand, and shape metadata.
    """
    num_layers = len(params)
    dims = [params[0][0].shape[0]] + [w.shape[1] for (w, _) in params]
    dims_p = [_round_up(d, _LANE) for d in dims]
    n_max_p = max(dims_p[1:])

    w_padded = []
    b_stack = jnp.zeros((num_layers, n_max_p), dtype=jnp.float32)
    for layer, (w, b) in enumerate(params):
        kin, kout = w.shape
        assert kin == dims[layer] and kout == dims[layer + 1]
        kin_p, kout_p = dims_p[layer], dims_p[layer + 1]
        w_p = (
            jnp.zeros((kin_p, kout_p), dtype=jnp.float32)
            .at[:kin, :kout]
            .set(w.astype(jnp.float32))
        )
        w_padded.append(w_p.astype(weight_dtype))
        b_stack = b_stack.at[layer, :kout].set(b.astype(jnp.float32))

    # TODO(synk): optionally support fp8 weight storage on v7x (f32 accumulate)
    # via weight_dtype once accuracy vs the f32 reference has been validated.
    return {
        "weights": tuple(w_padded),
        "bias_stack": b_stack,
        "dims": tuple(dims),
        "dims_p": tuple(dims_p),
        "num_layers": num_layers,
    }


def model_body_forward(states, prepared, *, m_tile=256):
    """Forward pass of ModelBody: one fused Pallas kernel over an M-tiled grid.

    states: (M, input_size) float32.  Returns (M, hidden_sizes[-1]) float32.
    """
    num_layers = prepared["num_layers"]
    dims = prepared["dims"]
    dims_p = prepared["dims_p"]
    weights = prepared["weights"]
    b_stack = prepared["bias_stack"]

    M, K0 = states.shape
    assert K0 == dims[0], f"states feature dim {K0} != expected {dims[0]}"
    K0p = dims_p[0]
    n_last, n_last_p = dims[-1], dims_p[-1]

    # Row tile: multiple of 8 sublanes, capped so the live activation slab and
    # the double-buffered x/out tiles stay small; pad M up to a tile multiple.
    mt = _round_up(min(m_tile, _round_up(M, _SUBLANE)), _SUBLANE)
    Mp = _round_up(M, mt)
    grid_m = Mp // mt

    # Only the per-call input needs padding; weights/bias were padded at init.
    if (Mp, K0p) != (M, K0):
        x_p = jnp.zeros((Mp, K0p), dtype=jnp.float32).at[:M, :K0].set(states)
    else:
        x_p = states

    in_specs = [pl.BlockSpec((mt, K0p), lambda i: (i, 0))]
    # Weights / stacked bias: constant index_map -> DMA'd once, stay resident.
    for w in weights:
        in_specs.append(pl.BlockSpec(w.shape, lambda i: (0, 0)))
    in_specs.append(pl.BlockSpec(b_stack.shape, lambda i: (0, 0)))
    out_specs = pl.BlockSpec((mt, n_last_p), lambda i: (i, 0))

    # VMEM budget: resident weights + bias + double-buffered x/out tiles.
    resident = sum(int(w.size) * w.dtype.itemsize for w in weights)
    resident += int(b_stack.size) * b_stack.dtype.itemsize
    per_tile = mt * (K0p + n_last_p) * 4
    vmem_limit = int(max(resident + 2 * per_tile + (8 << 20), 32 << 20))

    kernel = functools.partial(_fused_mlp_kernel, num_layers=num_layers)
    out_p = pl.pallas_call(
        kernel,
        out_shape=jax.ShapeDtypeStruct((Mp, n_last_p), jnp.float32),
        grid=(grid_m,),
        in_specs=in_specs,
        out_specs=out_specs,
        compiler_params=pltpu.CompilerParams(
            dimension_semantics=("parallel",),  # batch splits across v7x's 2 TCs
            vmem_limit_bytes=vmem_limit,
        ),
    )(x_p, *weights, b_stack)

    if (Mp, n_last_p) != (M, n_last):
        return out_p[:M, :n_last]
    return out_p


def init_model_body_params(key, input_size, hidden_sizes):
    """Deterministic synthetic init mirroring ModelBody.__init__ shapes.

    PyTorch nn.Linear(prev, h): weight (h, prev), bias (h,).  We store weights
    pre-transposed as (prev, h) for the kernel (y = x @ W + b).
    """
    params = []
    prev = input_size
    for h in hidden_sizes:
        key, wk, bk = jax.random.split(key, 3)
        w = jax.random.normal(wk, (prev, h), dtype=jnp.float32) * (1.0 / jnp.sqrt(prev))
        b = jax.random.normal(bk, (h,), dtype=jnp.float32) * 0.01
        params.append((w, b))
        prev = h
    return params


if __name__ == "__main__":
    # Small shapes consistent with ModelBody.forward: (batch, input_size) states.
    batch = 8
    input_size = 32
    hidden_sizes = (64, 32)

    key = jax.random.PRNGKey(0)
    key, xk = jax.random.split(key)
    states = jax.random.normal(xk, (batch, input_size), dtype=jnp.float32)

    params = init_model_body_params(key, input_size, hidden_sizes)
    prepared = prepare_model_body_params(params)  # one-time pad/pack (hoisted)

    out = jax.block_until_ready(model_body_forward(states, prepared))

    # Pure-JAX reference (same math, outside Pallas).
    ref = states
    for (w, b) in params:
        ref = jnp.maximum(ref @ w + b, 0.0)
    assert out.shape == (batch, hidden_sizes[-1])
    assert jnp.allclose(out, ref, atol=1e-5, rtol=1e-5)
    print("KERNEL_OK")
</pallas_src>

<mosaic_0001>
module attributes {stable_mosaic.version = 11 : i64} {
  func.func @_fused_mlp_kernel(%arg0: i32, %arg1: memref<8x128xf32, #tpu.memory_space<vmem>>, %arg2: memref<128x128xf32, #tpu.memory_space<vmem>>, %arg3: memref<128x128xf32, #tpu.memory_space<vmem>>, %arg4: memref<2x128xf32, #tpu.memory_space<vmem>>, %arg5: memref<8x128xf32, #tpu.memory_space<vmem>>) attributes {dimension_semantics = [#tpu.dimension_semantics<parallel>], iteration_bounds = array<i64: 1>, scalar_prefetch = 0 : i64, scratch_operands = 0 : i64, tpu.core_type = #tpu.core_type<tc>, window_params = [{transform_indices = @transform_0, window_bounds = array<i64: 8, 128>}, {pipeline_mode = #tpu.pipeline_mode<synchronous>, transform_indices = @transform_1, window_bounds = array<i64: 128, 128>}, {pipeline_mode = #tpu.pipeline_mode<synchronous>, transform_indices = @transform_2, window_bounds = array<i64: 128, 128>}, {pipeline_mode = #tpu.pipeline_mode<synchronous>, transform_indices = @transform_3, window_bounds = array<i64: 2, 128>}, {transform_indices = @transform_4, window_bounds = array<i64: 8, 128>}]} {
    %c0 = arith.constant 0 : index
    %c0_0 = arith.constant 0 : index
    %0 = vector.load %arg4[%c0, %c0_0] : memref<2x128xf32, #tpu.memory_space<vmem>>, vector<2x128xf32>
    %c0_1 = arith.constant 0 : index
    %c0_2 = arith.constant 0 : index
    %1 = vector.load %arg1[%c0_1, %c0_2] : memref<8x128xf32, #tpu.memory_space<vmem>>, vector<8x128xf32>
    %c0_3 = arith.constant 0 : index
    %c0_4 = arith.constant 0 : index
    %2 = vector.load %arg2[%c0_3, %c0_4] : memref<128x128xf32, #tpu.memory_space<vmem>>, vector<128x128xf32>
    %cst = arith.constant dense<0.000000e+00> : vector<8x128xf32>
    %3 = tpu.matmul %1, %2, %cst {dimension_numbers = #tpu.dot_dimension_numbers<[1], [0], [0], [1], [0, 0, 1, 1], [], []>} : vector<8x128xf32>, vector<128x128xf32>, vector<8x128xf32> -> vector<8x128xf32>
    %4 = vector.extract_strided_slice %0 {offsets = [0, 0], sizes = [1, 128], strides = [1, 1]} : vector<2x128xf32> to vector<1x128xf32>
    %5 = vector.shape_cast %4 : vector<1x128xf32> to vector<128xf32>
    %6 = vector.shape_cast %5 : vector<128xf32> to vector<1x128xf32>
    %7 = vector.broadcast %6 : vector<1x128xf32> to vector<8x128xf32>
    %8 = arith.addf %3, %7 : vector<8x128xf32>
    %cst_5 = arith.constant 0.000000e+00 : f32
    %9 = vector.broadcast %cst_5 : f32 to vector<8x128xf32>
    %10 = arith.maximumf %8, %9 : vector<8x128xf32>
    %c0_6 = arith.constant 0 : index
    %c0_7 = arith.constant 0 : index
    %11 = vector.load %arg3[%c0_6, %c0_7] : memref<128x128xf32, #tpu.memory_space<vmem>>, vector<128x128xf32>
    %cst_8 = arith.constant dense<0.000000e+00> : vector<8x128xf32>
    %12 = tpu.matmul %10, %11, %cst_8 {dimension_numbers = #tpu.dot_dimension_numbers<[1], [0], [0], [1], [0, 0, 1, 1], [], []>} : vector<8x128xf32>, vector<128x128xf32>, vector<8x128xf32> -> vector<8x128xf32>
    %13 = vector.extract_strided_slice %0 {offsets = [1, 0], sizes = [1, 128], strides = [1, 1]} : vector<2x128xf32> to vector<1x128xf32>
    %14 = vector.shape_cast %13 : vector<1x128xf32> to vector<128xf32>
    %15 = vector.shape_cast %14 : vector<128xf32> to vector<1x128xf32>
    %16 = vector.broadcast %15 : vector<1x128xf32> to vector<8x128xf32>
    %17 = arith.addf %12, %16 : vector<8x128xf32>
    %cst_9 = arith.constant 0.000000e+00 : f32
    %18 = vector.broadcast %cst_9 : f32 to vector<8x128xf32>
    %19 = arith.maximumf %17, %18 : vector<8x128xf32>
    %c0_10 = arith.constant 0 : index
    %c0_11 = arith.constant 0 : index
    %20 = vector.load %arg5[%c0_10, %c0_11] : memref<8x128xf32, #tpu.memory_space<vmem>>, vector<8x128xf32>
    tpu.vector_store %arg5[%c0_10, %c0_11], %19 {strides = array<i32>} : memref<8x128xf32, #tpu.memory_space<vmem>>, vector<8x128xf32>,
    return
  }
  func.func @transform_0(%arg0: i32) -> (i32, i32) {
    %c0_i32 = arith.constant 0 : i32
    %c0_i32_0 = arith.constant 0 : i32
    return %arg0, %c0_i32 : i32, i32
  }
  func.func @transform_1(%arg0: i32) -> (i32, i32) {
    %c0_i32 = arith.constant 0 : i32
    %c0_i32_0 = arith.constant 0 : i32
    %c0_i32_1 = arith.constant 0 : i32
    return %c0_i32, %c0_i32_0 : i32, i32
  }
  func.func @transform_2(%arg0: i32) -> (i32, i32) {
    %c0_i32 = arith.constant 0 : i32
    %c0_i32_0 = arith.constant 0 : i32
    %c0_i32_1 = arith.constant 0 : i32
    return %c0_i32, %c0_i32_0 : i32, i32
  }
  func.func @transform_3(%arg0: i32) -> (i32, i32) {
    %c0_i32 = arith.constant 0 : i32
    %c0_i32_0 = arith.constant 0 : i32
    %c0_i32_1 = arith.constant 0 : i32
    return %c0_i32, %c0_i32_0 : i32, i32
  }
  func.func @transform_4(%arg0: i32) -> (i32, i32) {
    %c0_i32 = arith.constant 0 : i32
    %c0_i32_0 = arith.constant 0 : i32
    return %arg0, %c0_i32 : i32, i32
  }
}

</mosaic_0001>

<llo_original>
// kernel: tpu_custom_call.1
$region0: #{tpu_custom_call.1}
  #allocation0 [shape = 'u32[]', space=smem, size = 0x4, offset = 0x4, fixed_abs, tag = 'smem constant byte address 0x4 - core index']
  #allocation1 [shape = 'u32[72,128]{1,0:T(1,128)}', space=vmem, size = 0x9000, scoped, tag = 'internal scratch']
  %s0 = inlined_call_operand.hbm [shape: f32[8,128], index: 0, kind: input, shape index: {}]
  %s1 = inlined_call_operand.hbm [shape: f32[128,128], index: 1, kind: input, shape index: {}]
  %s2 = inlined_call_operand.hbm [shape: f32[128,128], index: 2, kind: input, shape index: {}]
  %s3 = inlined_call_operand.vmem [shape: f32[2,128], index: 3, kind: input, shape index: {}]
  %s4 = inlined_call_operand.hbm [shape: f32[8,128], index: 4, kind: output, shape index: {}]
  %s5 = sld [smem:[#allocation0]]
  $region38: #{tpu_custom_call.1} parent=0
    _
  %s7 = ssub.s32 1, %s5
  %s8 = scalar_select 0, %s7, %s5
  $region1: #{tpu_custom_call.1} parent=0
    #allocation2 [shape = 'u8[4096]{0}', space=vmem, size = 0x1000, scoped, tag = 'input window, operand 0, single buffered']
    #allocation3 [shape = 's32[1]{0}', space=sflag, size = 0x4, scoped, tag = 'scoped memory for tpu_custom_call.1']
    #allocation4 [shape = 's32[1]{0}', space=sflag, size = 0x4, scoped, tag = 'scoped memory for tpu_custom_call.1']
    #allocation5 [shape = 'u8[65536]{0}', space=vmem, size = 0x10000, scoped, tag = 'input window, operand 1, single buffered']
    #allocation6 [shape = 's32[1]{0}', space=sflag, size = 0x4, scoped, tag = 'scoped memory for tpu_custom_call.1']
    #allocation7 [shape = 'u8[65536]{0}', space=vmem, size = 0x10000, scoped, tag = 'input window, operand 2, single buffered']
    #allocation8 [shape = 'u8[4096]{0}', space=vmem, size = 0x1000, scoped, tag = 'output window, operand 0, single buffered']
    %9 = vsyncpa [#allocation3], 0
    %10 = vsyncpa [#allocation6], 0
    %11 = vsyncpa [#allocation4], 0
    // Predicated region
    $region2: #{tpu_custom_call.1} parent=1 // pred_check
      _
    $region3: #{tpu_custom_call.1} parent=1 // pred_check_branch
      %13 = sbr.rel (0) target = $region5
    $region4: #{tpu_custom_call.1} parent=1 // pred_region
      %15 = vsyncadd [#allocation3], 0
      %s17 = sshll.u32 %s0, 4
      %s18 = int_to_ptr.hbm [resolvable:$true] %s17
      %s19 = sshll.u32 [#allocation2], 4
      %s20 = int_to_ptr.vmem [resolvable:$true] %s19
      %22 = dma.hbm_to_vmem [thread:$0]  %s18, 128, %s20, [#allocation3]
    $region5: #{tpu_custom_call.1} parent=1 // pred_fallthru
      _
    // Predicated region
    $region6: #{tpu_custom_call.1} parent=1 // pred_check
      _
    $region7: #{tpu_custom_call.1} parent=1 // pred_check_branch
      %24 = sbr.rel (0) target = $region9
    $region8: #{tpu_custom_call.1} parent=1 // pred_region
      %26 = vsyncadd [#allocation6], 0
      %s27 = sshll.u32 %s1, 4
      %s28 = int_to_ptr.hbm [resolvable:$true] %s27
      %s29 = sshll.u32 [#allocation5], 4
      %s30 = int_to_ptr.vmem [resolvable:$true] %s29
      %35 = dma.hbm_to_vmem [thread:$0]  %s28, 2048, %s30, [#allocation6], 128, 128, 8
    $region9: #{tpu_custom_call.1} parent=1 // pred_fallthru
      _
    // Predicated region
    $region10: #{tpu_custom_call.1} parent=1 // pred_check
      _
    $region11: #{tpu_custom_call.1} parent=1 // pred_check_branch
      %37 = sbr.rel (0) target = $region13
    $region12: #{tpu_custom_call.1} parent=1 // pred_region
      %39 = vsyncadd [#allocation6], 0
      %s40 = sshll.u32 %s2, 4
      %s41 = int_to_ptr.hbm [resolvable:$true] %s40
      %s42 = sshll.u32 [#allocation7], 4
      %s43 = int_to_ptr.vmem [resolvable:$true] %s42
      %48 = dma.hbm_to_vmem [thread:$0]  %s41, 2048, %s43, [#allocation6], 128, 128, 8
    $region13: #{tpu_custom_call.1} parent=1 // pred_fallthru
      _
    // Predicated region
    $region14: #{tpu_custom_call.1} parent=1 // pred_check
      _
    $region15: #{tpu_custom_call.1} parent=1 // pred_check_branch
      %50 = sbr.rel (0) target = $region17
    $region16: #{tpu_custom_call.1} parent=1 // pred_region
      _
    $region17: #{tpu_custom_call.1} parent=1 // pred_fallthru
      _
    // Predicated region
    $region18: #{tpu_custom_call.1} parent=1 // pred_check
      _
    $region19: #{tpu_custom_call.1} parent=1 // pred_check_branch
      %52 = sbr.rel (0) target = $region21
    $region20: #{tpu_custom_call.1} parent=1 // pred_region
      %54 = dma.done [#allocation3], 128
    $region21: #{tpu_custom_call.1} parent=1 // pred_fallthru
      _
    // Predicated region
    $region22: #{tpu_custom_call.1} parent=1 // pred_check
      _
    $region23: #{tpu_custom_call.1} parent=1 // pred_check_branch
      %56 = sbr.rel (0) target = $region25
    $region24: #{tpu_custom_call.1} parent=1 // pred_region
      %58 = dma.done [#allocation6], 2048
    $region25: #{tpu_custom_call.1} parent=1 // pred_fallthru
      _
    // Predicated region
    $region26: #{tpu_custom_call.1} parent=1 // pred_check
      _
    $region27: #{tpu_custom_call.1} parent=1 // pred_check_branch
      %60 = sbr.rel (0) target = $region29
    $region28: #{tpu_custom_call.1} parent=1 // pred_region
      %62 = dma.done [#allocation6], 2048
    $region29: #{tpu_custom_call.1} parent=1 // pred_fallthru
      _
    %v63 = vld [vmem:[%s3] sm:$0x3]
    %v64 = vld [vmem:[#allocation2] sm:$0xff]
    %v65 = vld [vmem:[#allocation5] sm:$0xff]
    %v66 = vld [vmem:[#allocation5 + $0x8] sm:$0xff]
    %v67 = vld [vmem:[#allocation5 + $0x10] sm:$0xff]
    %v68 = vld [vmem:[#allocation5 + $0x18] sm:$0xff]
    %v69 = vld [vmem:[#allocation5 + $0x20] sm:$0xff]
    %v70 = vld [vmem:[#allocation5 + $0x28] sm:$0xff]
    %v71 = vld [vmem:[#allocation5 + $0x30] sm:$0xff]
    %v72 = vld [vmem:[#allocation5 + $0x38] sm:$0xff]
    %v73 = vld [vmem:[#allocation5 + $0x40] sm:$0xff]
    %v74 = vld [vmem:[#allocation5 + $0x48] sm:$0xff]
    %v75 = vld [vmem:[#allocation5 + $0x50] sm:$0xff]
    %v76 = vld [vmem:[#allocation5 + $0x58] sm:$0xff]
    %v77 = vld [vmem:[#allocation5 + $0x60] sm:$0xff]
    %v78 = vld [vmem:[#allocation5 + $0x68] sm:$0xff]
    %v79 = vld [vmem:[#allocation5 + $0x70] sm:$0xff]
    %v80 = vld [vmem:[#allocation5 + $0x78] sm:$0xff]
    %v81 = vperm.slane %v63, 0
    %82 = vmatpush.msra.mxu0 %v80
    %83 = vmatpush.msra.mxu0 %v79
    %84 = vmatpush.msra.mxu0 %v78
    %85 = vmatpush.msra.mxu0 %v77
    %86 = vmatpush.msra.mxu0 %v76
    %87 = vmatpush.msra.mxu0 %v75
    %88 = vmatpush.msra.mxu0 %v74
    %89 = vmatpush.msra.mxu0 %v73
    %90 = vmatpush.msra.mxu0 %v72
    %91 = vmatpush.msra.mxu0 %v71
    %92 = vmatpush.msra.mxu0 %v70
    %93 = vmatpush.msra.mxu0 %v69
    %94 = vmatpush.msra.mxu0 %v68
    %95 = vmatpush.msra.mxu0 %v67
    %96 = vmatpush.msra.mxu0 %v66
    %97 = vmatpush.msra.mxu0 %v65
    %98 = vmatmul.f32.gmra.mxu0 %v64
    %v99 = vpop.f32.mrf.mxu0
    %v100 = vadd.f32 %v81, %v99
    %101 = vdwg.mxu0
    %v102 = vmax.f32 %v100, 0.0
    %v103 = vld [vmem:[#allocation7] sm:$0xff]
    %v104 = vld [vmem:[#allocation7 + $0x8] sm:$0xff]
    %v105 = vld [vmem:[#allocation7 + $0x10] sm:$0xff]
    %v106 = vld [vmem:[#allocation7 + $0x18] sm:$0xff]
    %v107 = vld [vmem:[#allocation7 + $0x20] sm:$0xff]
    %v108 = vld [vmem:[#allocation7 + $0x28] sm:$0xff]
    %v109 = vld [vmem:[#allocation7 + $0x30] sm:$0xff]
    %v110 = vld [vmem:[#allocation7 + $0x38] sm:$0xff]
    %v111 = vld [vmem:[#allocation7 + $0x40] sm:$0xff]
    %v112 = vld [vmem:[#allocation7 + $0x48] sm:$0xff]
    %v113 = vld [vmem:[#allocation7 + $0x50] sm:$0xff]
    %v114 = vld [vmem:[#allocation7 + $0x58] sm:$0xff]
    %v115 = vld [vmem:[#allocation7 + $0x60] sm:$0xff]
    %v116 = vld [vmem:[#allocation7 + $0x68] sm:$0xff]
    %v117 = vld [vmem:[#allocation7 + $0x70] sm:$0xff]
    %v118 = vld [vmem:[#allocation7 + $0x78] sm:$0xff]
    %v119 = vperm.slane %v63, 1
    %120 = vmatpush.msra.mxu0 %v118
    %121 = vmatpush.msra.mxu0 %v117
    %122 = vmatpush.msra.mxu0 %v116
    %123 = vmatpush.msra.mxu0 %v115
    %124 = vmatpush.msra.mxu0 %v114
    %125 = vmatpush.msra.mxu0 %v113
    %126 = vmatpush.msra.mxu0 %v112
    %127 = vmatpush.msra.mxu0 %v111
    %128 = vmatpush.msra.mxu0 %v110
    %129 = vmatpush.msra.mxu0 %v109
    %130 = vmatpush.msra.mxu0 %v108
    %131 = vmatpush.msra.mxu0 %v107
    %132 = vmatpush.msra.mxu0 %v106
    %133 = vmatpush.msra.mxu0 %v105
    %134 = vmatpush.msra.mxu0 %v104
    %135 = vmatpush.msra.mxu0 %v103
    %136 = vmatmul.f32.gmra.mxu0 %v102
    %v137 = vpop.f32.mrf.mxu0
    %v138 = vadd.f32 %v119, %v137
    %139 = vdwg.mxu0
    %v140 = vmax.f32 %v138, 0.0
    %141 = vst [vmem:[#allocation8] sm:$0xff] %v140
    // Predicated region
    $region30: #{tpu_custom_call.1} parent=1 // pred_check
      _
    $region31: #{tpu_custom_call.1} parent=1 // pred_check_branch
      %143 = sbr.rel (0) target = $region33
    $region32: #{tpu_custom_call.1} parent=1 // pred_region
      %145 = vsyncadd [#allocation4], 0
      %s147 = sshll.u32 [#allocation8], 4
      %s148 = int_to_ptr.vmem [resolvable:$true] %s147
      %s149 = sshll.u32 %s4, 4
      %s150 = int_to_ptr.hbm [resolvable:$true] %s149
      %152 = dma.vmem_to_hbm [thread:$0]  %s148, 128, %s150, [#allocation4]
    $region33: #{tpu_custom_call.1} parent=1 // pred_fallthru
      _
    // Predicated region
    $region34: #{tpu_custom_call.1} parent=1 // pred_check
      _
    $region35: #{tpu_custom_call.1} parent=1 // pred_check_branch
      %154 = sbr.rel (0) target = $region37
    $region36: #{tpu_custom_call.1} parent=1 // pred_region
      %156 = dma.done [#allocation4], 128
    $region37: #{tpu_custom_call.1} parent=1 // pred_fallthru
      _
    %157 = vsyncpa [#allocation3], 1
    %158 = vsyncpa [#allocation6], 1
    %159 = vsyncpa [#allocation4], 1

</llo_original>
